<compile_context>
chip_gen: v6e
topology: v6e:2x2x1
jax: 0.10.0
libtpu: 0.0.40
codegen_flags: <defaults>
</compile_context>

<pallas_src>
import jax
import jax.numpy as jnp
from jax.experimental import pallas as pl
from jax.experimental.pallas import tpu as pltpu

LEAKY_SLOPE = 0.01  # PyTorch nn.LeakyReLU default negative_slope


def _leaky_relu(x):
    return jnp.where(x >= 0, x, LEAKY_SLOPE * x)


def _round_up(n, m):
    return ((n + m - 1) // m) * m


def _affine_t(w_ref, b_ref, h, n_in):
    """y = W @ h + b with W:(out,in) in VMEM, h:(in, TB) value, b:(out,1).

    Unrolled outer-product accumulation over the tiny contraction dim
    (3 or 10) -> pure VPU broadcast-FMAs, no MXU push/drain latency.
    """
    acc = w_ref[:, 0:1] * h[0:1, :] + b_ref[...]
    for i in range(1, n_in):
        acc = acc + w_ref[:, i:i + 1] * h[i:i + 1, :]
    return acc


def mlp_kernel(x_ref, w1_ref, b1_ref, w2_ref, b2_ref, w3_ref, b3_ref, o_ref):
    x = x_ref[...].astype(jnp.float32)                    # (3, TB), batch on lanes
    h1 = _leaky_relu(_affine_t(w1_ref, b1_ref, x, 3))     # (10, TB)
    h2 = _leaky_relu(_affine_t(w2_ref, b2_ref, h1, 10))   # (10, TB)
    z = _affine_t(w3_ref, b3_ref, h2, 10)                 # (1, TB) lane-dense
    o_ref[...] = z.astype(o_ref.dtype)


def mlp_forward(x, params, *, tile_b=512):
    """x: (B, 3) float32 -> (B, 1) float32."""
    w1, b1, w2, b2, w3, b3 = params  # weights (out, in), biases (out, 1)
    B = x.shape[0]

    # Batch tile on the lane axis: multiple of 128, capped at tile_b.
    tb = min(tile_b, _round_up(B, 128))
    Bp = _round_up(B, tb)

    # Pad batch then transpose -> (3, Bp): features on sublanes, batch on lanes.
    xT = jnp.pad(x.astype(jnp.float32), ((0, Bp - B), (0, 0))).T

    grid = (Bp // tb,)
    resident = lambda a: pl.BlockSpec(a.shape, lambda i: (0, 0))  # stays in VMEM

    n_w = sum(int(p.size) for p in params)
    cost = pl.CostEstimate(
        flops=2 * Bp * (3 * 10 + 10 * 10 + 10 * 1),
        transcendentals=0,
        bytes_accessed=4 * (Bp * 3 + Bp * 1 + n_w),
    )

    out = pl.pallas_call(
        mlp_kernel,
        out_shape=jax.ShapeDtypeStruct((1, Bp), jnp.float32),
        grid=grid,
        in_specs=[
            pl.BlockSpec((3, tb), lambda i: (0, i)),   # streamed activations
            resident(w1), resident(b1),
            resident(w2), resident(b2),
            resident(w3), resident(b3),
        ],
        out_specs=pl.BlockSpec((1, tb), lambda i: (0, i)),
        compiler_params=pltpu.CompilerParams(
            dimension_semantics=("parallel",),          # shard batch tiles across TCs (v7x)
        ),
        cost_estimate=cost,
    )(xT, w1, b1, w2, b2, w3, b3)

    return out[0, :B][:, None]  # back to (B, 1) like nn.Linear output


def init_params(key):
    """Deterministic init mimicking PyTorch Linear default (U[-1/sqrt(fan_in), +]).

    Weights kept in PyTorch (out_features, in_features) layout; biases (out, 1)
    so they broadcast along the lane/batch axis inside the kernel.
    """
    def linear(key, fan_in, fan_out):
        kw, kb = jax.random.split(key)
        bound = 1.0 / jnp.sqrt(fan_in)
        w = jax.random.uniform(kw, (fan_out, fan_in), jnp.float32, -bound, bound)
        b = jax.random.uniform(kb, (fan_out, 1), jnp.float32, -bound, bound)
        return w, b

    k1, k2, k3 = jax.random.split(key, 3)
    w1, b1 = linear(k1, 3, 10)
    w2, b2 = linear(k2, 10, 10)
    w3, b3 = linear(k3, 10, 1)
    return (w1, b1, w2, b2, w3, b3)


def mlp_reference(x, params):
    """Pure-JAX reference for correctness check (torch semantics: x @ W.T + b)."""
    w1, b1, w2, b2, w3, b3 = params
    h1 = _leaky_relu(x @ w1.T + b1.T)
    h2 = _leaky_relu(h1 @ w2.T + b2.T)
    return h2 @ w3.T + b3.T


if __name__ == "__main__":
    key = jax.random.PRNGKey(0)
    k_params, k_x1, k_x2 = jax.random.split(key, 3)

    params = init_params(k_params)

    # Small shape consistent with the module: batch=8, in_features=3.
    x = jax.random.normal(k_x1, (8, 3), dtype=jnp.float32)
    out = jax.block_until_ready(mlp_forward(x, params))
    ref = mlp_reference(x, params)
    assert out.shape == (8, 1), out.shape
    assert jnp.allclose(out, ref, atol=1e-5, rtol=1e-5)

    # Secondary smoke test: non-multiple-of-tile batch exercises the grid + padding.
    x2 = jax.random.normal(k_x2, (1000, 3), dtype=jnp.float32)
    out2 = jax.block_until_ready(mlp_forward(x2, params))
    ref2 = mlp_reference(x2, params)
    assert out2.shape == (1000, 1), out2.shape
    assert jnp.allclose(out2, ref2, atol=1e-5, rtol=1e-5)

    print("KERNEL_OK")
</pallas_src>

<mosaic_0001>
module attributes {stable_mosaic.version = 11 : i64} {
  func.func @mlp_kernel(%arg0: i32, %arg1: memref<3x128xf32, #tpu.memory_space<vmem>>, %arg2: memref<10x3xf32, #tpu.memory_space<vmem>>, %arg3: memref<10x1xf32, #tpu.memory_space<vmem>>, %arg4: memref<10x10xf32, #tpu.memory_space<vmem>>, %arg5: memref<10x1xf32, #tpu.memory_space<vmem>>, %arg6: memref<1x10xf32, #tpu.memory_space<vmem>>, %arg7: memref<1x1xf32, #tpu.memory_space<vmem>>, %arg8: memref<1x128xf32, #tpu.memory_space<vmem>>) attributes {dimension_semantics = [#tpu.dimension_semantics<parallel>], iteration_bounds = array<i64: 1>, scalar_prefetch = 0 : i64, scratch_operands = 0 : i64, tpu.core_type = #tpu.core_type<tc>, window_params = [{transform_indices = @transform_0, window_bounds = array<i64: 3, 128>}, {pipeline_mode = #tpu.pipeline_mode<synchronous>, transform_indices = @transform_1, window_bounds = array<i64: 10, 3>}, {pipeline_mode = #tpu.pipeline_mode<synchronous>, transform_indices = @transform_2, window_bounds = array<i64: 10, 1>}, {pipeline_mode = #tpu.pipeline_mode<synchronous>, transform_indices = @transform_3, window_bounds = array<i64: 10, 10>}, {pipeline_mode = #tpu.pipeline_mode<synchronous>, transform_indices = @transform_4, window_bounds = array<i64: 10, 1>}, {pipeline_mode = #tpu.pipeline_mode<synchronous>, transform_indices = @transform_5, window_bounds = array<i64: 1, 10>}, {pipeline_mode = #tpu.pipeline_mode<synchronous>, transform_indices = @transform_6, window_bounds = array<i64: 1, 1>}, {transform_indices = @transform_7, window_bounds = array<i64: 1, 128>}]} {
    %c0 = arith.constant 0 : index
    %c0_0 = arith.constant 0 : index
    %0 = vector.load %arg1[%c0, %c0_0] : memref<3x128xf32, #tpu.memory_space<vmem>>, vector<3x128xf32>
    %c0_1 = arith.constant 0 : index
    %c0_2 = arith.constant 0 : index
    %1 = vector.load %arg2[%c0_1, %c0_2] : memref<10x3xf32, #tpu.memory_space<vmem>>, vector<10x1xf32>
    %2 = vector.extract_strided_slice %0 {offsets = [0, 0], sizes = [1, 128], strides = [1, 1]} : vector<3x128xf32> to vector<1x128xf32>
    %3 = vector.broadcast %1 : vector<10x1xf32> to vector<10x128xf32>
    %4 = vector.broadcast %2 : vector<1x128xf32> to vector<10x128xf32>
    %5 = arith.mulf %3, %4 : vector<10x128xf32>
    %c0_3 = arith.constant 0 : index
    %c0_4 = arith.constant 0 : index
    %6 = vector.load %arg3[%c0_3, %c0_4] : memref<10x1xf32, #tpu.memory_space<vmem>>, vector<10x1xf32>
    %7 = vector.broadcast %6 : vector<10x1xf32> to vector<10x128xf32>
    %8 = arith.addf %5, %7 : vector<10x128xf32>
    %c0_5 = arith.constant 0 : index
    %c1 = arith.constant 1 : index
    %9 = vector.load %arg2[%c0_5, %c1] : memref<10x3xf32, #tpu.memory_space<vmem>>, vector<10x1xf32>
    %10 = vector.extract_strided_slice %0 {offsets = [1, 0], sizes = [1, 128], strides = [1, 1]} : vector<3x128xf32> to vector<1x128xf32>
    %11 = vector.broadcast %9 : vector<10x1xf32> to vector<10x128xf32>
    %12 = vector.broadcast %10 : vector<1x128xf32> to vector<10x128xf32>
    %13 = arith.mulf %11, %12 : vector<10x128xf32>
    %14 = arith.addf %8, %13 : vector<10x128xf32>
    %c0_6 = arith.constant 0 : index
    %c2 = arith.constant 2 : index
    %15 = vector.load %arg2[%c0_6, %c2] : memref<10x3xf32, #tpu.memory_space<vmem>>, vector<10x1xf32>
    %16 = vector.extract_strided_slice %0 {offsets = [2, 0], sizes = [1, 128], strides = [1, 1]} : vector<3x128xf32> to vector<1x128xf32>
    %17 = vector.broadcast %15 : vector<10x1xf32> to vector<10x128xf32>
    %18 = vector.broadcast %16 : vector<1x128xf32> to vector<10x128xf32>
    %19 = arith.mulf %17, %18 : vector<10x128xf32>
    %20 = arith.addf %14, %19 : vector<10x128xf32>
    %cst = arith.constant 0.000000e+00 : f32
    %21 = vector.broadcast %cst : f32 to vector<10x128xf32>
    %22 = arith.cmpf oge, %20, %21 : vector<10x128xf32>
    %cst_7 = arith.constant 0.00999999977 : f32
    %23 = vector.broadcast %cst_7 : f32 to vector<10x128xf32>
    %24 = arith.mulf %23, %20 : vector<10x128xf32>
    %25 = arith.select %22, %20, %24 : vector<10x128xi1>, vector<10x128xf32>
    %c0_8 = arith.constant 0 : index
    %c0_9 = arith.constant 0 : index
    %26 = vector.load %arg4[%c0_8, %c0_9] : memref<10x10xf32, #tpu.memory_space<vmem>>, vector<10x1xf32>
    %27 = vector.extract_strided_slice %25 {offsets = [0, 0], sizes = [1, 128], strides = [1, 1]} : vector<10x128xf32> to vector<1x128xf32>
    %28 = vector.broadcast %26 : vector<10x1xf32> to vector<10x128xf32>
    %29 = vector.broadcast %27 : vector<1x128xf32> to vector<10x128xf32>
    %30 = arith.mulf %28, %29 : vector<10x128xf32>
    %c0_10 = arith.constant 0 : index
    %c0_11 = arith.constant 0 : index
    %31 = vector.load %arg5[%c0_10, %c0_11] : memref<10x1xf32, #tpu.memory_space<vmem>>, vector<10x1xf32>
    %32 = vector.broadcast %31 : vector<10x1xf32> to vector<10x128xf32>
    %33 = arith.addf %30, %32 : vector<10x128xf32>
    %c0_12 = arith.constant 0 : index
    %c1_13 = arith.constant 1 : index
    %34 = vector.load %arg4[%c0_12, %c1_13] : memref<10x10xf32, #tpu.memory_space<vmem>>, vector<10x1xf32>
    %35 = vector.extract_strided_slice %25 {offsets = [1, 0], sizes = [1, 128], strides = [1, 1]} : vector<10x128xf32> to vector<1x128xf32>
    %36 = vector.broadcast %34 : vector<10x1xf32> to vector<10x128xf32>
    %37 = vector.broadcast %35 : vector<1x128xf32> to vector<10x128xf32>
    %38 = arith.mulf %36, %37 : vector<10x128xf32>
    %39 = arith.addf %33, %38 : vector<10x128xf32>
    %c0_14 = arith.constant 0 : index
    %c2_15 = arith.constant 2 : index
    %40 = vector.load %arg4[%c0_14, %c2_15] : memref<10x10xf32, #tpu.memory_space<vmem>>, vector<10x1xf32>
    %41 = vector.extract_strided_slice %25 {offsets = [2, 0], sizes = [1, 128], strides = [1, 1]} : vector<10x128xf32> to vector<1x128xf32>
    %42 = vector.broadcast %40 : vector<10x1xf32> to vector<10x128xf32>
    %43 = vector.broadcast %41 : vector<1x128xf32> to vector<10x128xf32>
    %44 = arith.mulf %42, %43 : vector<10x128xf32>
    %45 = arith.addf %39, %44 : vector<10x128xf32>
    %c0_16 = arith.constant 0 : index
    %c3 = arith.constant 3 : index
    %46 = vector.load %arg4[%c0_16, %c3] : memref<10x10xf32, #tpu.memory_space<vmem>>, vector<10x1xf32>
    %47 = vector.extract_strided_slice %25 {offsets = [3, 0], sizes = [1, 128], strides = [1, 1]} : vector<10x128xf32> to vector<1x128xf32>
    %48 = vector.broadcast %46 : vector<10x1xf32> to vector<10x128xf32>
    %49 = vector.broadcast %47 : vector<1x128xf32> to vector<10x128xf32>
    %50 = arith.mulf %48, %49 : vector<10x128xf32>
    %51 = arith.addf %45, %50 : vector<10x128xf32>
    %c0_17 = arith.constant 0 : index
    %c4 = arith.constant 4 : index
    %52 = vector.load %arg4[%c0_17, %c4] : memref<10x10xf32, #tpu.memory_space<vmem>>, vector<10x1xf32>
    %53 = vector.extract_strided_slice %25 {offsets = [4, 0], sizes = [1, 128], strides = [1, 1]} : vector<10x128xf32> to vector<1x128xf32>
    %54 = vector.broadcast %52 : vector<10x1xf32> to vector<10x128xf32>
    %55 = vector.broadcast %53 : vector<1x128xf32> to vector<10x128xf32>
    %56 = arith.mulf %54, %55 : vector<10x128xf32>
    %57 = arith.addf %51, %56 : vector<10x128xf32>
    %c0_18 = arith.constant 0 : index
    %c5 = arith.constant 5 : index
    %58 = vector.load %arg4[%c0_18, %c5] : memref<10x10xf32, #tpu.memory_space<vmem>>, vector<10x1xf32>
    %59 = vector.extract_strided_slice %25 {offsets = [5, 0], sizes = [1, 128], strides = [1, 1]} : vector<10x128xf32> to vector<1x128xf32>
    %60 = vector.broadcast %58 : vector<10x1xf32> to vector<10x128xf32>
    %61 = vector.broadcast %59 : vector<1x128xf32> to vector<10x128xf32>
    %62 = arith.mulf %60, %61 : vector<10x128xf32>
    %63 = arith.addf %57, %62 : vector<10x128xf32>
    %c0_19 = arith.constant 0 : index
    %c6 = arith.constant 6 : index
    %64 = vector.load %arg4[%c0_19, %c6] : memref<10x10xf32, #tpu.memory_space<vmem>>, vector<10x1xf32>
    %65 = vector.extract_strided_slice %25 {offsets = [6, 0], sizes = [1, 128], strides = [1, 1]} : vector<10x128xf32> to vector<1x128xf32>
    %66 = vector.broadcast %64 : vector<10x1xf32> to vector<10x128xf32>
    %67 = vector.broadcast %65 : vector<1x128xf32> to vector<10x128xf32>
    %68 = arith.mulf %66, %67 : vector<10x128xf32>
    %69 = arith.addf %63, %68 : vector<10x128xf32>
    %c0_20 = arith.constant 0 : index
    %c7 = arith.constant 7 : index
    %70 = vector.load %arg4[%c0_20, %c7] : memref<10x10xf32, #tpu.memory_space<vmem>>, vector<10x1xf32>
    %71 = vector.extract_strided_slice %25 {offsets = [7, 0], sizes = [1, 128], strides = [1, 1]} : vector<10x128xf32> to vector<1x128xf32>
    %72 = vector.broadcast %70 : vector<10x1xf32> to vector<10x128xf32>
    %73 = vector.broadcast %71 : vector<1x128xf32> to vector<10x128xf32>
    %74 = arith.mulf %72, %73 : vector<10x128xf32>
    %75 = arith.addf %69, %74 : vector<10x128xf32>
    %c0_21 = arith.constant 0 : index
    %c8 = arith.constant 8 : index
    %76 = vector.load %arg4[%c0_21, %c8] : memref<10x10xf32, #tpu.memory_space<vmem>>, vector<10x1xf32>
    %77 = vector.extract_strided_slice %25 {offsets = [8, 0], sizes = [1, 128], strides = [1, 1]} : vector<10x128xf32> to vector<1x128xf32>
    %78 = vector.broadcast %76 : vector<10x1xf32> to vector<10x128xf32>
    %79 = vector.broadcast %77 : vector<1x128xf32> to vector<10x128xf32>
    %80 = arith.mulf %78, %79 : vector<10x128xf32>
    %81 = arith.addf %75, %80 : vector<10x128xf32>
    %c0_22 = arith.constant 0 : index
    %c9 = arith.constant 9 : index
    %82 = vector.load %arg4[%c0_22, %c9] : memref<10x10xf32, #tpu.memory_space<vmem>>, vector<10x1xf32>
    %83 = vector.extract_strided_slice %25 {offsets = [9, 0], sizes = [1, 128], strides = [1, 1]} : vector<10x128xf32> to vector<1x128xf32>
    %84 = vector.broadcast %82 : vector<10x1xf32> to vector<10x128xf32>
    %85 = vector.broadcast %83 : vector<1x128xf32> to vector<10x128xf32>
    %86 = arith.mulf %84, %85 : vector<10x128xf32>
    %87 = arith.addf %81, %86 : vector<10x128xf32>
    %cst_23 = arith.constant 0.000000e+00 : f32
    %88 = vector.broadcast %cst_23 : f32 to vector<10x128xf32>
    %89 = arith.cmpf oge, %87, %88 : vector<10x128xf32>
    %cst_24 = arith.constant 0.00999999977 : f32
    %90 = vector.broadcast %cst_24 : f32 to vector<10x128xf32>
    %91 = arith.mulf %90, %87 : vector<10x128xf32>
    %92 = arith.select %89, %87, %91 : vector<10x128xi1>, vector<10x128xf32>
    %c0_25 = arith.constant 0 : index
    %c0_26 = arith.constant 0 : index
    %93 = vector.load %arg6[%c0_25, %c0_26] : memref<1x10xf32, #tpu.memory_space<vmem>>, vector<1x1xf32>
    %94 = vector.extract_strided_slice %92 {offsets = [0, 0], sizes = [1, 128], strides = [1, 1]} : vector<10x128xf32> to vector<1x128xf32>
    %95 = vector.broadcast %93 : vector<1x1xf32> to vector<1x128xf32>
    %96 = arith.mulf %95, %94 : vector<1x128xf32>
    %c0_27 = arith.constant 0 : index
    %c0_28 = arith.constant 0 : index
    %97 = vector.load %arg7[%c0_27, %c0_28] : memref<1x1xf32, #tpu.memory_space<vmem>>, vector<1x1xf32>
    %98 = vector.broadcast %97 : vector<1x1xf32> to vector<1x128xf32>
    %99 = arith.addf %96, %98 : vector<1x128xf32>
    %c0_29 = arith.constant 0 : index
    %c1_30 = arith.constant 1 : index
    %100 = vector.load %arg6[%c0_29, %c1_30] : memref<1x10xf32, #tpu.memory_space<vmem>>, vector<1x1xf32>
    %101 = vector.extract_strided_slice %92 {offsets = [1, 0], sizes = [1, 128], strides = [1, 1]} : vector<10x128xf32> to vector<1x128xf32>
    %102 = vector.broadcast %100 : vector<1x1xf32> to vector<1x128xf32>
    %103 = arith.mulf %102, %101 : vector<1x128xf32>
    %104 = arith.addf %99, %103 : vector<1x128xf32>
    %c0_31 = arith.constant 0 : index
    %c2_32 = arith.constant 2 : index
    %105 = vector.load %arg6[%c0_31, %c2_32] : memref<1x10xf32, #tpu.memory_space<vmem>>, vector<1x1xf32>
    %106 = vector.extract_strided_slice %92 {offsets = [2, 0], sizes = [1, 128], strides = [1, 1]} : vector<10x128xf32> to vector<1x128xf32>
    %107 = vector.broadcast %105 : vector<1x1xf32> to vector<1x128xf32>
    %108 = arith.mulf %107, %106 : vector<1x128xf32>
    %109 = arith.addf %104, %108 : vector<1x128xf32>
    %c0_33 = arith.constant 0 : index
    %c3_34 = arith.constant 3 : index
    %110 = vector.load %arg6[%c0_33, %c3_34] : memref<1x10xf32, #tpu.memory_space<vmem>>, vector<1x1xf32>
    %111 = vector.extract_strided_slice %92 {offsets = [3, 0], sizes = [1, 128], strides = [1, 1]} : vector<10x128xf32> to vector<1x128xf32>
    %112 = vector.broadcast %110 : vector<1x1xf32> to vector<1x128xf32>
    %113 = arith.mulf %112, %111 : vector<1x128xf32>
    %114 = arith.addf %109, %113 : vector<1x128xf32>
    %c0_35 = arith.constant 0 : index
    %c4_36 = arith.constant 4 : index
    %115 = vector.load %arg6[%c0_35, %c4_36] : memref<1x10xf32, #tpu.memory_space<vmem>>, vector<1x1xf32>
    %116 = vector.extract_strided_slice %92 {offsets = [4, 0], sizes = [1, 128], strides = [1, 1]} : vector<10x128xf32> to vector<1x128xf32>
    %117 = vector.broadcast %115 : vector<1x1xf32> to vector<1x128xf32>
    %118 = arith.mulf %117, %116 : vector<1x128xf32>
    %119 = arith.addf %114, %118 : vector<1x128xf32>
    %c0_37 = arith.constant 0 : index
    %c5_38 = arith.constant 5 : index
    %120 = vector.load %arg6[%c0_37, %c5_38] : memref<1x10xf32, #tpu.memory_space<vmem>>, vector<1x1xf32>
    %121 = vector.extract_strided_slice %92 {offsets = [5, 0], sizes = [1, 128], strides = [1, 1]} : vector<10x128xf32> to vector<1x128xf32>
    %122 = vector.broadcast %120 : vector<1x1xf32> to vector<1x128xf32>
    %123 = arith.mulf %122, %121 : vector<1x128xf32>
    %124 = arith.addf %119, %123 : vector<1x128xf32>
    %c0_39 = arith.constant 0 : index
    %c6_40 = arith.constant 6 : index
    %125 = vector.load %arg6[%c0_39, %c6_40] : memref<1x10xf32, #tpu.memory_space<vmem>>, vector<1x1xf32>
    %126 = vector.extract_strided_slice %92 {offsets = [6, 0], sizes = [1, 128], strides = [1, 1]} : vector<10x128xf32> to vector<1x128xf32>
    %127 = vector.broadcast %125 : vector<1x1xf32> to vector<1x128xf32>
    %128 = arith.mulf %127, %126 : vector<1x128xf32>
    %129 = arith.addf %124, %128 : vector<1x128xf32>
    %c0_41 = arith.constant 0 : index
    %c7_42 = arith.constant 7 : index
    %130 = vector.load %arg6[%c0_41, %c7_42] : memref<1x10xf32, #tpu.memory_space<vmem>>, vector<1x1xf32>
    %131 = vector.extract_strided_slice %92 {offsets = [7, 0], sizes = [1, 128], strides = [1, 1]} : vector<10x128xf32> to vector<1x128xf32>
    %132 = vector.broadcast %130 : vector<1x1xf32> to vector<1x128xf32>
    %133 = arith.mulf %132, %131 : vector<1x128xf32>
    %134 = arith.addf %129, %133 : vector<1x128xf32>
    %c0_43 = arith.constant 0 : index
    %c8_44 = arith.constant 8 : index
    %135 = vector.load %arg6[%c0_43, %c8_44] : memref<1x10xf32, #tpu.memory_space<vmem>>, vector<1x1xf32>
    %136 = vector.extract_strided_slice %92 {offsets = [8, 0], sizes = [1, 128], strides = [1, 1]} : vector<10x128xf32> to vector<1x128xf32>
    %137 = vector.broadcast %135 : vector<1x1xf32> to vector<1x128xf32>
    %138 = arith.mulf %137, %136 : vector<1x128xf32>
    %139 = arith.addf %134, %138 : vector<1x128xf32>
    %c0_45 = arith.constant 0 : index
    %c9_46 = arith.constant 9 : index
    %140 = vector.load %arg6[%c0_45, %c9_46] : memref<1x10xf32, #tpu.memory_space<vmem>>, vector<1x1xf32>
    %141 = vector.extract_strided_slice %92 {offsets = [9, 0], sizes = [1, 128], strides = [1, 1]} : vector<10x128xf32> to vector<1x128xf32>
    %142 = vector.broadcast %140 : vector<1x1xf32> to vector<1x128xf32>
    %143 = arith.mulf %142, %141 : vector<1x128xf32>
    %144 = arith.addf %139, %143 : vector<1x128xf32>
    %c0_47 = arith.constant 0 : index
    %c0_48 = arith.constant 0 : index
    %145 = vector.load %arg8[%c0_47, %c0_48] : memref<1x128xf32, #tpu.memory_space<vmem>>, vector<1x128xf32>
    tpu.vector_store %arg8[%c0_47, %c0_48], %144 {strides = array<i32>} : memref<1x128xf32, #tpu.memory_space<vmem>>, vector<1x128xf32>,
    return
  }
  func.func @transform_0(%arg0: i32) -> (i32, i32) {
    %c0_i32 = arith.constant 0 : i32
    %c0_i32_0 = arith.constant 0 : i32
    return %c0_i32, %arg0 : i32, i32
  }
  func.func @transform_1(%arg0: i32) -> (i32, i32) {
    %c0_i32 = arith.constant 0 : i32
    %c0_i32_0 = arith.constant 0 : i32
    %c0_i32_1 = arith.constant 0 : i32
    return %c0_i32, %c0_i32_0 : i32, i32
  }
  func.func @transform_2(%arg0: i32) -> (i32, i32) {
    %c0_i32 = arith.constant 0 : i32
    %c0_i32_0 = arith.constant 0 : i32
    %c0_i32_1 = arith.constant 0 : i32
    return %c0_i32, %c0_i32_0 : i32, i32
  }
  func.func @transform_3(%arg0: i32) -> (i32, i32) {
    %c0_i32 = arith.constant 0 : i32
    %c0_i32_0 = arith.constant 0 : i32
    %c0_i32_1 = arith.constant 0 : i32
    return %c0_i32, %c0_i32_0 : i32, i32
  }
  func.func @transform_4(%arg0: i32) -> (i32, i32) {
    %c0_i32 = arith.constant 0 : i32
    %c0_i32_0 = arith.constant 0 : i32
    %c0_i32_1 = arith.constant 0 : i32
    return %c0_i32, %c0_i32_0 : i32, i32
  }
  func.func @transform_5(%arg0: i32) -> (i32, i32) {
    %c0_i32 = arith.constant 0 : i32
    %c0_i32_0 = arith.constant 0 : i32
    %c0_i32_1 = arith.constant 0 : i32
    return %c0_i32, %c0_i32_0 : i32, i32
  }
  func.func @transform_6(%arg0: i32) -> (i32, i32) {
    %c0_i32 = arith.constant 0 : i32
    %c0_i32_0 = arith.constant 0 : i32
    %c0_i32_1 = arith.constant 0 : i32
    return %c0_i32, %c0_i32_0 : i32, i32
  }
  func.func @transform_7(%arg0: i32) -> (i32, i32) {
    %c0_i32 = arith.constant 0 : i32
    %c0_i32_0 = arith.constant 0 : i32
    return %c0_i32, %arg0 : i32, i32
  }
}

</mosaic_0001>

<llo_original>
// kernel: tpu_custom_call.1
$region0: #{tpu_custom_call.1}
  #allocation0 [shape = 'u32[]', space=smem, size = 0x4, offset = 0x4, fixed_abs, tag = 'smem constant byte address 0x4 - core index']
  #allocation1 [shape = 'u32[144,128]{1,0:T(1,128)}', space=vmem, size = 0x12000, scoped, tag = 'internal scratch']
  #allocation2 [shape = 'f32[1,1]{1,0:T(1,128)S(1)}', space=vmem, size = 0x200, scoped, tag = 'scoped memory for tpu_custom_call.1']
  %s0 = inlined_call_operand.vmem [shape: f32[3,128], index: 0, kind: input, shape index: {}]
  %s1 = inlined_call_operand.vmem [shape: f32[10,3], index: 1, kind: input, shape index: {}]
  %s2 = inlined_call_operand.vmem [shape: f32[10,1], index: 2, kind: input, shape index: {}]
  %s3 = inlined_call_operand.vmem [shape: f32[10,10], index: 3, kind: input, shape index: {}]
  %s4 = inlined_call_operand.vmem [shape: f32[10,1], index: 4, kind: input, shape index: {}]
  %s5 = inlined_call_operand.vmem [shape: f32[1,10], index: 5, kind: input, shape index: {}]
  %s6 = inlined_call_operand.<no memory space> [shape: f32[1,1], index: 6, kind: input, shape index: {}]
  %s7 = inlined_call_operand.hbm [shape: f32[1,128], index: 7, kind: output, shape index: {}]
  %s8 = sld [smem:[#allocation0]]
  $region38: #{tpu_custom_call.1} parent=0
    _
  %s10 = ssub.s32 1, %s8
  %s11 = scalar_select 0, %s10, %s8
  %v12 = vstv %s6
  %13 = vst [vmem:[#allocation2] sm:$0x1] %v12
  $region1: #{tpu_custom_call.1} parent=0
    #allocation3 [shape = 'u8[512]{0}', space=vmem, size = 0x400, scoped, tag = 'output window, operand 0, single buffered']
    #allocation4 [shape = 's32[1]{0}', space=sflag, size = 0x4, scoped, tag = 'scoped memory for tpu_custom_call.1']
    %14 = vsyncpa [#allocation4], 0
    // Predicated region
    $region2: #{tpu_custom_call.1} parent=1 // pred_check
      _
    $region3: #{tpu_custom_call.1} parent=1 // pred_check_branch
      %16 = sbr.rel (0) target = $region5
    $region4: #{tpu_custom_call.1} parent=1 // pred_region
      _
    $region5: #{tpu_custom_call.1} parent=1 // pred_fallthru
      _
    // Predicated region
    $region6: #{tpu_custom_call.1} parent=1 // pred_check
      _
    $region7: #{tpu_custom_call.1} parent=1 // pred_check_branch
      %18 = sbr.rel (0) target = $region9
    $region8: #{tpu_custom_call.1} parent=1 // pred_region
      _
    $region9: #{tpu_custom_call.1} parent=1 // pred_fallthru
      _
    // Predicated region
    $region10: #{tpu_custom_call.1} parent=1 // pred_check
      _
    $region11: #{tpu_custom_call.1} parent=1 // pred_check_branch
      %20 = sbr.rel (0) target = $region13
    $region12: #{tpu_custom_call.1} parent=1 // pred_region
      _
    $region13: #{tpu_custom_call.1} parent=1 // pred_fallthru
      _
    // Predicated region
    $region14: #{tpu_custom_call.1} parent=1 // pred_check
      _
    $region15: #{tpu_custom_call.1} parent=1 // pred_check_branch
      %22 = sbr.rel (0) target = $region17
    $region16: #{tpu_custom_call.1} parent=1 // pred_region
      _
    $region17: #{tpu_custom_call.1} parent=1 // pred_fallthru
      _
    // Predicated region
    $region18: #{tpu_custom_call.1} parent=1 // pred_check
      _
    $region19: #{tpu_custom_call.1} parent=1 // pred_check_branch
      %24 = sbr.rel (0) target = $region21
    $region20: #{tpu_custom_call.1} parent=1 // pred_region
      _
    $region21: #{tpu_custom_call.1} parent=1 // pred_fallthru
      _
    // Predicated region
    $region22: #{tpu_custom_call.1} parent=1 // pred_check
      _
    $region23: #{tpu_custom_call.1} parent=1 // pred_check_branch
      %26 = sbr.rel (0) target = $region25
    $region24: #{tpu_custom_call.1} parent=1 // pred_region
      _
    $region25: #{tpu_custom_call.1} parent=1 // pred_fallthru
      _
    // Predicated region
    $region26: #{tpu_custom_call.1} parent=1 // pred_check
      _
    $region27: #{tpu_custom_call.1} parent=1 // pred_check_branch
      %28 = sbr.rel (0) target = $region29
    $region28: #{tpu_custom_call.1} parent=1 // pred_region
      _
    $region29: #{tpu_custom_call.1} parent=1 // pred_fallthru
      _
    %v29 = vld [vmem:[%s0] sm:$0x7]
    %v30 = vld [vmem:[%s1] sm:$0xff]
    %v31 = vld [vmem:[%s1 + $0x8] sm:$0x3]
    %33 = vset.pattern.permute.xlu0 0
    %34 = vperm.xlu0 %33, %v30
    %v35 = vpop.permute.xlu0 %34
    %38 = vset.pattern.permute.xlu0 0
    %39 = vperm.xlu0 %38, %v31
    %v40 = vpop.permute.xlu0 %39
    %v42 = vlaneseq
    %v43 = vshrl.u32 %v42, 7
    %v44 = vsub.s32 0, %v43
    %v45 = vrot.slane %v29, %v44
    %v46 = vmul.f32 %v35, %v45
    %v47 = vmul.f32 %v40, %v45
    %v48 = vld [vmem:[%s2] sm:$0xff]
    %v49 = vld [vmem:[%s2 + $0x8] sm:$0x3]
    %51 = vset.pattern.permute.xlu0 0
    %52 = vperm.xlu0 %51, %v48
    %v53 = vpop.permute.xlu0 %52
    %56 = vset.pattern.permute.xlu0 0
    %57 = vperm.xlu0 %56, %v49
    %v58 = vpop.permute.xlu0 %57
    %v60 = vadd.f32 %v46, %v53
    %v61 = vadd.f32 %v47, %v58
    %62 = vset.pattern.permute.xlu0 1
    %63 = vperm.xlu0 %62, %v30
    %v64 = vpop.permute.xlu0 %63
    %66 = vset.pattern.permute.xlu0 1
    %67 = vperm.xlu0 %66, %v31
    %v68 = vpop.permute.xlu0 %67
    %v70 = vlaneseq
    %v71 = vshrl.u32 %v70, 7
    %v72 = vsub.s32 1, %v71
    %v73 = vrot.slane %v29, %v72
    %v74 = vmul.f32 %v64, %v73
    %v75 = vmul.f32 %v68, %v73
    %v76 = vadd.f32 %v60, %v74
    %v77 = vadd.f32 %v61, %v75
    %78 = vset.pattern.permute.xlu0 2
    %79 = vperm.xlu0 %78, %v30
    %v80 = vpop.permute.xlu0 %79
    %82 = vset.pattern.permute.xlu0 2
    %83 = vperm.xlu0 %82, %v31
    %v84 = vpop.permute.xlu0 %83
    %v86 = vlaneseq
    %v87 = vshrl.u32 %v86, 7
    %v88 = vsub.s32 2, %v87
    %v89 = vrot.slane %v29, %v88
    %v90 = vmul.f32 %v80, %v89
    %v91 = vmul.f32 %v84, %v89
    %v92 = vadd.f32 %v76, %v90
    %v93 = vadd.f32 %v77, %v91
    %vm94 = vcmp.ge.f32.partialorder %v92, 0.0
    %vm95 = vcmp.ge.f32.partialorder %v93, 0.0
    %v96 = vmul.f32 %v92, 0.01
    %v97 = vmul.f32 %v93, 0.01
    %v98 = vsel %vm94, %v92, %v96
    %v99 = vsel %vm95, %v93, %v97
    %v100 = vld [vmem:[%s3] sm:$0xff]
    %v101 = vld [vmem:[%s3 + $0x8] sm:$0x3]
    %103 = vset.pattern.permute.xlu0 0
    %104 = vperm.xlu0 %103, %v100
    %v105 = vpop.permute.xlu0 %104
    %108 = vset.pattern.permute.xlu0 0
    %109 = vperm.xlu0 %108, %v101
    %v110 = vpop.permute.xlu0 %109
    %v112 = vlaneseq
    %v113 = vshrl.u32 %v112, 7
    %v114 = vsub.s32 0, %v113
    %v115 = vrot.slane %v98, %v114
    %v116 = vmul.f32 %v105, %v115
    %v117 = vmul.f32 %v110, %v115
    %v118 = vld [vmem:[%s4] sm:$0xff]
    %v119 = vld [vmem:[%s4 + $0x8] sm:$0x3]
    %121 = vset.pattern.permute.xlu0 0
    %122 = vperm.xlu0 %121, %v118
    %v123 = vpop.permute.xlu0 %122
    %126 = vset.pattern.permute.xlu0 0
    %127 = vperm.xlu0 %126, %v119
    %v128 = vpop.permute.xlu0 %127
    %v130 = vadd.f32 %v116, %v123
    %v131 = vadd.f32 %v117, %v128
    %132 = vset.pattern.permute.xlu0 1
    %133 = vperm.xlu0 %132, %v100
    %v134 = vpop.permute.xlu0 %133
    %136 = vset.pattern.permute.xlu0 1
    %137 = vperm.xlu0 %136, %v101
    %v138 = vpop.permute.xlu0 %137
    %v140 = vlaneseq
    %v141 = vshrl.u32 %v140, 7
    %v142 = vsub.s32 1, %v141
    %v143 = vrot.slane %v98, %v142
    %v144 = vmul.f32 %v134, %v143
    %v145 = vmul.f32 %v138, %v143
    %v146 = vadd.f32 %v130, %v144
    %v147 = vadd.f32 %v131, %v145
    %148 = vset.pattern.permute.xlu0 2
    %149 = vperm.xlu0 %148, %v100
    %v150 = vpop.permute.xlu0 %149
    %152 = vset.pattern.permute.xlu0 2
    %153 = vperm.xlu0 %152, %v101
    %v154 = vpop.permute.xlu0 %153
    %v156 = vlaneseq
    %v157 = vshrl.u32 %v156, 7
    %v158 = vsub.s32 2, %v157
    %v159 = vrot.slane %v98, %v158
    %v160 = vmul.f32 %v150, %v159
    %v161 = vmul.f32 %v154, %v159
    %v162 = vadd.f32 %v146, %v160
    %v163 = vadd.f32 %v147, %v161
    %164 = vset.pattern.permute.xlu0 3
    %165 = vperm.xlu0 %164, %v100
    %v166 = vpop.permute.xlu0 %165
    %168 = vset.pattern.permute.xlu0 3
    %169 = vperm.xlu0 %168, %v101
    %v170 = vpop.permute.xlu0 %169
    %v172 = vlaneseq
    %v173 = vshrl.u32 %v172, 7
    %v174 = vsub.s32 3, %v173
    %v175 = vrot.slane %v98, %v174
    %v176 = vmul.f32 %v166, %v175
    %v177 = vmul.f32 %v170, %v175
    %v178 = vadd.f32 %v162, %v176
    %v179 = vadd.f32 %v163, %v177
    %180 = vset.pattern.permute.xlu0 4
    %181 = vperm.xlu0 %180, %v100
    %v182 = vpop.permute.xlu0 %181
    %184 = vset.pattern.permute.xlu0 4
    %185 = vperm.xlu0 %184, %v101
    %v186 = vpop.permute.xlu0 %185
    %v188 = vlaneseq
    %v189 = vshrl.u32 %v188, 7
    %v190 = vsub.s32 4, %v189
    %v191 = vrot.slane %v98, %v190
    %v192 = vmul.f32 %v182, %v191
    %v193 = vmul.f32 %v186, %v191
    %v194 = vadd.f32 %v178, %v192
    %v195 = vadd.f32 %v179, %v193
    %196 = vset.pattern.permute.xlu0 5
    %197 = vperm.xlu0 %196, %v100
    %v198 = vpop.permute.xlu0 %197
    %200 = vset.pattern.permute.xlu0 5
    %201 = vperm.xlu0 %200, %v101
    %v202 = vpop.permute.xlu0 %201
    %v204 = vlaneseq
    %v205 = vshrl.u32 %v204, 7
    %v206 = vsub.s32 5, %v205
    %v207 = vrot.slane %v98, %v206
    %v208 = vmul.f32 %v198, %v207
    %v209 = vmul.f32 %v202, %v207
    %v210 = vadd.f32 %v194, %v208
    %v211 = vadd.f32 %v195, %v209
    %212 = vset.pattern.permute.xlu0 6
    %213 = vperm.xlu0 %212, %v100
    %v214 = vpop.permute.xlu0 %213
    %216 = vset.pattern.permute.xlu0 6
    %217 = vperm.xlu0 %216, %v101
    %v218 = vpop.permute.xlu0 %217
    %v220 = vlaneseq
    %v221 = vshrl.u32 %v220, 7
    %v222 = vsub.s32 6, %v221
    %v223 = vrot.slane %v98, %v222
    %v224 = vmul.f32 %v214, %v223
    %v225 = vmul.f32 %v218, %v223
    %v226 = vadd.f32 %v210, %v224
    %v227 = vadd.f32 %v211, %v225
    %228 = vset.pattern.permute.xlu0 7
    %229 = vperm.xlu0 %228, %v100
    %v230 = vpop.permute.xlu0 %229
    %232 = vset.pattern.permute.xlu0 7
    %233 = vperm.xlu0 %232, %v101
    %v234 = vpop.permute.xlu0 %233
    %v236 = vlaneseq
    %v237 = vshrl.u32 %v236, 7
    %v238 = vsub.s32 7, %v237
    %v239 = vrot.slane %v98, %v238
    %v240 = vmul.f32 %v230, %v239
    %v241 = vmul.f32 %v234, %v239
    %v242 = vadd.f32 %v226, %v240
    %v243 = vadd.f32 %v227, %v241
    %244 = vset.pattern.permute.xlu0 8
    %245 = vperm.xlu0 %244, %v100
    %v246 = vpop.permute.xlu0 %245
    %248 = vset.pattern.permute.xlu0 8
    %249 = vperm.xlu0 %248, %v101
    %v250 = vpop.permute.xlu0 %249
    %v252 = vlaneseq
    %v253 = vshrl.u32 %v252, 7
    %v254 = vsub.s32 0, %v253
    %v255 = vrot.slane %v99, %v254
    %v256 = vmul.f32 %v246, %v255
    %v257 = vmul.f32 %v250, %v255
    %v258 = vadd.f32 %v242, %v256
    %v259 = vadd.f32 %v243, %v257
    %260 = vset.pattern.permute.xlu0 9
    %261 = vperm.xlu0 %260, %v100
    %v262 = vpop.permute.xlu0 %261
    %264 = vset.pattern.permute.xlu0 9
    %265 = vperm.xlu0 %264, %v101
    %v266 = vpop.permute.xlu0 %265
    %v268 = vlaneseq
    %v269 = vshrl.u32 %v268, 7
    %v270 = vsub.s32 1, %v269
    %v271 = vrot.slane %v99, %v270
    %v272 = vmul.f32 %v262, %v271
    %v273 = vmul.f32 %v266, %v271
    %v274 = vadd.f32 %v258, %v272
    %v275 = vadd.f32 %v259, %v273
    %vm276 = vcmp.ge.f32.partialorder %v274, 0.0
    %vm277 = vcmp.ge.f32.partialorder %v275, 0.0
    %v278 = vmul.f32 %v274, 0.01
    %v279 = vmul.f32 %v275, 0.01
    %v280 = vsel %vm276, %v274, %v278
    %v281 = vsel %vm277, %v275, %v279
    %v282 = vld [vmem:[%s5] sm:$0x1]
    %284 = vset.pattern.permute.xlu0 0
    %285 = vperm.xlu0 %284, %v282
    %v286 = vpop.permute.xlu0 %285
    %v288 = vlaneseq
    %v289 = vshrl.u32 %v288, 7
    %v290 = vsub.s32 0, %v289
    %v291 = vrot.slane %v286, %v290
    %v292 = vmul.f32 %v291, %v280
    %v293 = vld [vmem:[#allocation2] sm:$0x1]
    %295 = vset.pattern.permute.xlu0 0
    %296 = vperm.xlu0 %295, %v293
    %v297 = vpop.permute.xlu0 %296
    %v299 = vlaneseq
    %v300 = vshrl.u32 %v299, 7
    %v301 = vsub.s32 0, %v300
    %v302 = vrot.slane %v297, %v301
    %v303 = vadd.f32 %v292, %v302
    %304 = vset.pattern.permute.xlu0 1
    %305 = vperm.xlu0 %304, %v282
    %v306 = vpop.permute.xlu0 %305
    %v308 = vlaneseq
    %v309 = vshrl.u32 %v308, 7
    %v310 = vsub.s32 0, %v309
    %v311 = vrot.slane %v306, %v310
    %v312 = vmul.f32 %v311, %v280
    %v314 = vrot.slane %v312, 1
    %v316 = vadd.f32 %v303, %v314
    %317 = vset.pattern.permute.xlu0 2
    %318 = vperm.xlu0 %317, %v282
    %v319 = vpop.permute.xlu0 %318
    %v321 = vlaneseq
    %v322 = vshrl.u32 %v321, 7
    %v323 = vsub.s32 0, %v322
    %v324 = vrot.slane %v319, %v323
    %v325 = vmul.f32 %v324, %v280
    %v327 = vrot.slane %v325, 2
    %v329 = vadd.f32 %v316, %v327
    %330 = vset.pattern.permute.xlu0 3
    %331 = vperm.xlu0 %330, %v282
    %v332 = vpop.permute.xlu0 %331
    %v334 = vlaneseq
    %v335 = vshrl.u32 %v334, 7
    %v336 = vsub.s32 0, %v335
    %v337 = vrot.slane %v332, %v336
    %v338 = vmul.f32 %v337, %v280
    %v340 = vrot.slane %v338, 3
    %v342 = vadd.f32 %v329, %v340
    %343 = vset.pattern.permute.xlu0 4
    %344 = vperm.xlu0 %343, %v282
    %v345 = vpop.permute.xlu0 %344
    %v347 = vlaneseq
    %v348 = vshrl.u32 %v347, 7
    %v349 = vsub.s32 0, %v348
    %v350 = vrot.slane %v345, %v349
    %v351 = vmul.f32 %v350, %v280
    %v353 = vrot.slane %v351, 4
    %v355 = vadd.f32 %v342, %v353
    %356 = vset.pattern.permute.xlu0 5
    %357 = vperm.xlu0 %356, %v282
    %v358 = vpop.permute.xlu0 %357
    %v360 = vlaneseq
    %v361 = vshrl.u32 %v360, 7
    %v362 = vsub.s32 0, %v361
    %v363 = vrot.slane %v358, %v362
    %v364 = vmul.f32 %v363, %v280
    %v366 = vrot.slane %v364, 5
    %v368 = vadd.f32 %v355, %v366
    %369 = vset.pattern.permute.xlu0 6
    %370 = vperm.xlu0 %369, %v282
    %v371 = vpop.permute.xlu0 %370
    %v373 = vlaneseq
    %v374 = vshrl.u32 %v373, 7
    %v375 = vsub.s32 0, %v374
    %v376 = vrot.slane %v371, %v375
    %v377 = vmul.f32 %v376, %v280
    %v379 = vrot.slane %v377, 6
    %v381 = vadd.f32 %v368, %v379
    %382 = vset.pattern.permute.xlu0 7
    %383 = vperm.xlu0 %382, %v282
    %v384 = vpop.permute.xlu0 %383
    %v386 = vlaneseq
    %v387 = vshrl.u32 %v386, 7
    %v388 = vsub.s32 0, %v387
    %v389 = vrot.slane %v384, %v388
    %v390 = vmul.f32 %v389, %v280
    %v392 = vrot.slane %v390, 7
    %v394 = vadd.f32 %v381, %v392
    %395 = vset.pattern.permute.xlu0 8
    %396 = vperm.xlu0 %395, %v282
    %v397 = vpop.permute.xlu0 %396
    %v399 = vlaneseq
    %v400 = vshrl.u32 %v399, 7
    %v401 = vsub.s32 0, %v400
    %v402 = vrot.slane %v397, %v401
    %v403 = vmul.f32 %v402, %v281
    %v404 = vadd.f32 %v394, %v403
    %405 = vset.pattern.permute.xlu0 9
    %406 = vperm.xlu0 %405, %v282
    %v407 = vpop.permute.xlu0 %406
    %v409 = vlaneseq
    %v410 = vshrl.u32 %v409, 7
    %v411 = vsub.s32 0, %v410
    %v412 = vrot.slane %v407, %v411
    %v413 = vmul.f32 %v412, %v281
    %v415 = vrot.slane %v413, 1
    %v417 = vadd.f32 %v404, %v415
    %418 = vst [vmem:[#allocation3] sm:$0x1] %v417
    // Predicated region
    $region30: #{tpu_custom_call.1} parent=1 // pred_check
      _
    $region31: #{tpu_custom_call.1} parent=1 // pred_check_branch
      %420 = sbr.rel (0) target = $region33
    $region32: #{tpu_custom_call.1} parent=1 // pred_region
      %s422 = ssub.s32 16, 16
      %423 = vsyncadd [#allocation4], %s422
      %s425 = sshll.u32 [#allocation3], 4
      %s426 = int_to_ptr.vmem [resolvable:$true] %s425
      %428 = dma.vmem_to_hbm [thread:$0]  %s426, 16, %s7, [#allocation4]
    $region33: #{tpu_custom_call.1} parent=1 // pred_fallthru
      _
    // Predicated region
    $region34: #{tpu_custom_call.1} parent=1 // pred_check
      _
    $region35: #{tpu_custom_call.1} parent=1 // pred_check_branch
      %430 = sbr.rel (0) target = $region37
    $region36: #{tpu_custom_call.1} parent=1 // pred_region
      %431 = dma.done [#allocation4], 16
    $region37: #{tpu_custom_call.1} parent=1 // pred_fallthru
      _
    %432 = vsyncpa [#allocation4], 1

</llo_original>
